<compile_context>
chip_gen: v7x
topology: tpu7x:2x2x1
jax: 0.10.0
libtpu: 0.0.40
codegen_flags: <defaults>
</compile_context>

<pallas_src>
import math

import jax
import jax.numpy as jnp
from jax.experimental import pallas as pl
from jax.experimental.pallas import tpu as pltpu


# -------------------- kernel ------------------------------------------------
def _swiglu_kernel(x_ref, wg_ref, wv_ref, o_ref, gate_acc, val_acc):
    k = pl.program_id(2)

    @pl.when(k == 0)
    def _():
        gate_acc[...] = jnp.zeros_like(gate_acc)
        val_acc[...] = jnp.zeros_like(val_acc)

    x = x_ref[...]  # shared x tile for both projections (single HBM read)
    gate_acc[...] += jnp.dot(x, wg_ref[...], preferred_element_type=jnp.float32)
    val_acc[...] += jnp.dot(x, wv_ref[...], preferred_element_type=jnp.float32)

    @pl.when(k == pl.num_programs(2) - 1)
    def _():
        g = gate_acc[...]
        silu = g * jax.nn.sigmoid(g)  # SiLU in f32; exp/sigmoid runs on the EUP
        o_ref[...] = (silu * val_acc[...]).astype(o_ref.dtype)


# -------------------- wrapper ------------------------------------------------
def _pick_tile(pref, full):
    """Use `pref` if it evenly tiles `full`, otherwise fall back to full dim."""
    if pref < full and full % pref == 0:
        return pref
    return full


def swiglu(x, w_gate, w_value, *, tm=256, tn=256, tk=256):
    """x: [..., D]; w_gate/w_value: [D, D] in (in_dim, out_dim) layout."""
    orig_shape = x.shape
    D = orig_shape[-1]
    M = 1
    for s in orig_shape[:-1]:
        M *= s
    x2 = x.reshape(M, D)                      # lane-dense 2-D layout
    wg = w_gate.astype(x.dtype)
    wv = w_value.astype(x.dtype)

    tm = _pick_tile(tm, M)
    tn = _pick_tile(tn, D)
    tk = _pick_tile(tk, D)
    grid = (pl.cdiv(M, tm), pl.cdiv(D, tn), pl.cdiv(D, tk))

    # Explicit VMEM budget: double-buffered x / Wg / Wv / out blocks + 2 f32
    # accumulators, with 2x headroom, clamped to stay inside v7x's 64 MiB.
    itemsize = jnp.dtype(x.dtype).itemsize
    block_bytes = 2 * (tm * tk + 2 * tk * tn + tm * tn) * itemsize + 2 * tm * tn * 4
    vmem_limit = int(min(max(2 * block_bytes, 16 * 1024 * 1024), 48 * 1024 * 1024))

    out2 = pl.pallas_call(
        _swiglu_kernel,
        out_shape=jax.ShapeDtypeStruct((M, D), x.dtype),
        grid_spec=pltpu.PrefetchScalarGridSpec(
            num_scalar_prefetch=0,
            grid=grid,
            in_specs=[
                pl.BlockSpec((tm, tk), lambda i, j, k: (i, k)),   # x
                pl.BlockSpec((tk, tn), lambda i, j, k: (k, j)),   # Wg
                pl.BlockSpec((tk, tn), lambda i, j, k: (k, j)),   # Wv
            ],
            out_specs=pl.BlockSpec((tm, tn), lambda i, j, k: (i, j)),
            scratch_shapes=[
                pltpu.VMEM((tm, tn), jnp.float32),   # gate accumulator
                pltpu.VMEM((tm, tn), jnp.float32),   # value accumulator
            ],
        ),
        compiler_params=pltpu.CompilerParams(
            dimension_semantics=("parallel", "parallel", "arbitrary"),
            vmem_limit_bytes=vmem_limit,
        ),
    )(x2, wg, wv)
    return out2.reshape(orig_shape)


# -------------------- main ----------------------------------------------------
if __name__ == "__main__":
    key = jax.random.PRNGKey(0)
    k1, k2, k3 = jax.random.split(key, 3)

    # Small shapes matching the module: batch=2, seq=8, dim=32.
    batch, seq, dim = 2, 8, 32
    x = jax.random.normal(k1, (batch, seq, dim), dtype=jnp.float32)
    w_gate = jax.random.normal(k2, (dim, dim), dtype=jnp.float32) / math.sqrt(dim)
    w_value = jax.random.normal(k3, (dim, dim), dtype=jnp.float32) / math.sqrt(dim)

    out = jax.block_until_ready(swiglu(x, w_gate, w_value))
    ref = jax.nn.silu(x @ w_gate) * (x @ w_value)
    assert out.shape == x.shape
    assert jnp.allclose(out, ref, atol=1e-3, rtol=1e-3), float(
        jnp.max(jnp.abs(out - ref))
    )

    # Second case exercising a multi-step grid (K accumulation + 2 output tiles).
    dim2 = 256
    x2 = jax.random.normal(k1, (2, 16, dim2), dtype=jnp.float32)
    wg2 = jax.random.normal(k2, (dim2, dim2), dtype=jnp.float32) / math.sqrt(dim2)
    wv2 = jax.random.normal(k3, (dim2, dim2), dtype=jnp.float32) / math.sqrt(dim2)
    out2 = jax.block_until_ready(swiglu(x2, wg2, wv2, tm=32, tn=128, tk=128))
    ref2 = jax.nn.silu(x2 @ wg2) * (x2 @ wv2)
    assert jnp.allclose(out2, ref2, atol=2e-3, rtol=2e-3), float(
        jnp.max(jnp.abs(out2 - ref2))
    )

    print("KERNEL_OK")
</pallas_src>

<mosaic_0001>
module attributes {stable_mosaic.version = 11 : i64} {
  func.func @_swiglu_kernel(%arg0: i32, %arg1: i32, %arg2: i32, %arg3: memref<16x32xf32, #tpu.memory_space<vmem>>, %arg4: memref<32x32xf32, #tpu.memory_space<vmem>>, %arg5: memref<32x32xf32, #tpu.memory_space<vmem>>, %arg6: memref<16x32xf32, #tpu.memory_space<vmem>>, %arg7: memref<16x32xf32, #tpu.memory_space<vmem>>, %arg8: memref<16x32xf32, #tpu.memory_space<vmem>>) attributes {dimension_semantics = [#tpu.dimension_semantics<parallel>, #tpu.dimension_semantics<parallel>, #tpu.dimension_semantics<arbitrary>], iteration_bounds = array<i64: 1, 1, 1>, scalar_prefetch = 0 : i64, scratch_operands = 2 : i64, tpu.core_type = #tpu.core_type<tc>, window_params = [{transform_indices = @transform_0, window_bounds = array<i64: 16, 32>}, {transform_indices = @transform_1, window_bounds = array<i64: 32, 32>}, {transform_indices = @transform_2, window_bounds = array<i64: 32, 32>}, {transform_indices = @transform_3, window_bounds = array<i64: 16, 32>}]} {
    %c0_i32 = arith.constant 0 : i32
    %0 = arith.cmpi eq, %arg2, %c0_i32 : i32
    %1 = arith.extui %0 : i1 to i32
    %c0_i32_0 = arith.constant 0 : i32
    %2 = arith.cmpi ne, %1, %c0_i32_0 : i32
    scf.if %2 {
      %cst_17 = arith.constant 0.000000e+00 : f32
      %17 = vector.broadcast %cst_17 : f32 to vector<16x32xf32>
      %c0_18 = arith.constant 0 : index
      %c0_19 = arith.constant 0 : index
      %18 = vector.load %arg7[%c0_18, %c0_19] : memref<16x32xf32, #tpu.memory_space<vmem>>, vector<16x32xf32>
      tpu.vector_store %arg7[%c0_18, %c0_19], %17 {strides = array<i32>} : memref<16x32xf32, #tpu.memory_space<vmem>>, vector<16x32xf32>,
      %cst_20 = arith.constant 0.000000e+00 : f32
      %19 = vector.broadcast %cst_20 : f32 to vector<16x32xf32>
      %c0_21 = arith.constant 0 : index
      %c0_22 = arith.constant 0 : index
      %20 = vector.load %arg8[%c0_21, %c0_22] : memref<16x32xf32, #tpu.memory_space<vmem>>, vector<16x32xf32>
      tpu.vector_store %arg8[%c0_21, %c0_22], %19 {strides = array<i32>} : memref<16x32xf32, #tpu.memory_space<vmem>>, vector<16x32xf32>,
    } else {
    }
    %c0 = arith.constant 0 : index
    %c0_1 = arith.constant 0 : index
    %3 = vector.load %arg3[%c0, %c0_1] : memref<16x32xf32, #tpu.memory_space<vmem>>, vector<16x32xf32>
    %c0_2 = arith.constant 0 : index
    %c0_3 = arith.constant 0 : index
    %4 = vector.load %arg7[%c0_2, %c0_3] : memref<16x32xf32, #tpu.memory_space<vmem>>, vector<16x32xf32>
    %c0_4 = arith.constant 0 : index
    %c0_5 = arith.constant 0 : index
    %5 = vector.load %arg4[%c0_4, %c0_5] : memref<32x32xf32, #tpu.memory_space<vmem>>, vector<32x32xf32>
    %cst = arith.constant dense<0.000000e+00> : vector<16x32xf32>
    %6 = tpu.matmul %3, %5, %cst {dimension_numbers = #tpu.dot_dimension_numbers<[1], [0], [0], [1], [0, 0, 1, 1], [], []>} : vector<16x32xf32>, vector<32x32xf32>, vector<16x32xf32> -> vector<16x32xf32>
    %7 = arith.addf %4, %6 : vector<16x32xf32>
    %c0_6 = arith.constant 0 : index
    %c0_7 = arith.constant 0 : index
    %8 = vector.load %arg7[%c0_6, %c0_7] : memref<16x32xf32, #tpu.memory_space<vmem>>, vector<16x32xf32>
    tpu.vector_store %arg7[%c0_6, %c0_7], %7 {strides = array<i32>} : memref<16x32xf32, #tpu.memory_space<vmem>>, vector<16x32xf32>,
    %c0_8 = arith.constant 0 : index
    %c0_9 = arith.constant 0 : index
    %9 = vector.load %arg8[%c0_8, %c0_9] : memref<16x32xf32, #tpu.memory_space<vmem>>, vector<16x32xf32>
    %c0_10 = arith.constant 0 : index
    %c0_11 = arith.constant 0 : index
    %10 = vector.load %arg5[%c0_10, %c0_11] : memref<32x32xf32, #tpu.memory_space<vmem>>, vector<32x32xf32>
    %cst_12 = arith.constant dense<0.000000e+00> : vector<16x32xf32>
    %11 = tpu.matmul %3, %10, %cst_12 {dimension_numbers = #tpu.dot_dimension_numbers<[1], [0], [0], [1], [0, 0, 1, 1], [], []>} : vector<16x32xf32>, vector<32x32xf32>, vector<16x32xf32> -> vector<16x32xf32>
    %12 = arith.addf %9, %11 : vector<16x32xf32>
    %c0_13 = arith.constant 0 : index
    %c0_14 = arith.constant 0 : index
    %13 = vector.load %arg8[%c0_13, %c0_14] : memref<16x32xf32, #tpu.memory_space<vmem>>, vector<16x32xf32>
    tpu.vector_store %arg8[%c0_13, %c0_14], %12 {strides = array<i32>} : memref<16x32xf32, #tpu.memory_space<vmem>>, vector<16x32xf32>,
    %c0_i32_15 = arith.constant 0 : i32
    %14 = arith.cmpi eq, %arg2, %c0_i32_15 : i32
    %15 = arith.extui %14 : i1 to i32
    %c0_i32_16 = arith.constant 0 : i32
    %16 = arith.cmpi ne, %15, %c0_i32_16 : i32
    scf.if %16 {
      %c0_17 = arith.constant 0 : index
      %c0_18 = arith.constant 0 : index
      %17 = vector.load %arg7[%c0_17, %c0_18] : memref<16x32xf32, #tpu.memory_space<vmem>>, vector<16x32xf32>
      %18 = arith.negf %17 : vector<16x32xf32>
      %19 = math.exp %18 : vector<16x32xf32>
      %cst_19 = arith.constant 1.000000e+00 : f32
      %20 = vector.broadcast %cst_19 : f32 to vector<16x32xf32>
      %21 = arith.addf %20, %19 : vector<16x32xf32>
      %22 = arith.divf %20, %21 : vector<16x32xf32>
      %23 = arith.mulf %17, %22 : vector<16x32xf32>
      %c0_20 = arith.constant 0 : index
      %c0_21 = arith.constant 0 : index
      %24 = vector.load %arg8[%c0_20, %c0_21] : memref<16x32xf32, #tpu.memory_space<vmem>>, vector<16x32xf32>
      %25 = arith.mulf %23, %24 : vector<16x32xf32>
      %c0_22 = arith.constant 0 : index
      %c0_23 = arith.constant 0 : index
      %26 = vector.load %arg6[%c0_22, %c0_23] : memref<16x32xf32, #tpu.memory_space<vmem>>, vector<16x32xf32>
      tpu.vector_store %arg6[%c0_22, %c0_23], %25 {strides = array<i32>} : memref<16x32xf32, #tpu.memory_space<vmem>>, vector<16x32xf32>,
    } else {
    }
    return
  }
  func.func @transform_0(%arg0: i32, %arg1: i32, %arg2: i32) -> (i32, i32) {
    %c0_i32 = arith.constant 0 : i32
    return %arg0, %arg2 : i32, i32
  }
  func.func @transform_1(%arg0: i32, %arg1: i32, %arg2: i32) -> (i32, i32) {
    %c0_i32 = arith.constant 0 : i32
    return %arg2, %arg1 : i32, i32
  }
  func.func @transform_2(%arg0: i32, %arg1: i32, %arg2: i32) -> (i32, i32) {
    %c0_i32 = arith.constant 0 : i32
    return %arg2, %arg1 : i32, i32
  }
  func.func @transform_3(%arg0: i32, %arg1: i32, %arg2: i32) -> (i32, i32) {
    %c0_i32 = arith.constant 0 : i32
    return %arg0, %arg1 : i32, i32
  }
}

</mosaic_0001>

<llo_original>
// kernel: tpu_custom_call.1
$region0: #{tpu_custom_call.1}
  #allocation0 [shape = 'u32[]', space=smem, size = 0x4, offset = 0x4, fixed_abs, tag = 'smem constant byte address 0x4 - core index']
  #allocation1 [shape = 'u32[144,128]{1,0:T(1,128)}', space=vmem, size = 0x12000, scoped, tag = 'internal scratch']
  #allocation2 [shape = 'f32[16,32]{1,0:T(8,128)}', space=vmem, size = 0x2000, scoped, tag = 'scratch operand']
  #allocation3 [shape = 'f32[16,32]{1,0:T(8,128)}', space=vmem, size = 0x2000, scoped, tag = 'scratch operand']
  %s0 = inlined_call_operand.hbm [shape: f32[16,32], index: 0, kind: input, shape index: {}]
  %s1 = inlined_call_operand.hbm [shape: f32[32,32], index: 1, kind: input, shape index: {}]
  %s2 = inlined_call_operand.hbm [shape: f32[32,32], index: 2, kind: input, shape index: {}]
  %s3 = inlined_call_operand.hbm [shape: f32[16,32], index: 3, kind: output, shape index: {}]
  %s4 = sld [smem:[#allocation0]]
  $region42: #{tpu_custom_call.1} parent=0
    _
  %s6 = ssub.s32 1, %s4
  %s7 = scalar_select 0, %s6, %s4
  $region1: #{tpu_custom_call.1} parent=0
    #allocation4 [shape = 'u8[8192]{0}', space=vmem, size = 0x2000, scoped, tag = 'input window, operand 0, single buffered']
    #allocation5 [shape = 's32[1]{0}', space=sflag, size = 0x4, scoped, tag = 'scoped memory for tpu_custom_call.1']
    #allocation6 [shape = 's32[1]{0}', space=sflag, size = 0x4, scoped, tag = 'scoped memory for tpu_custom_call.1']
    #allocation7 [shape = 'u8[16384]{0}', space=vmem, size = 0x4000, scoped, tag = 'input window, operand 1, single buffered']
    #allocation8 [shape = 's32[1]{0}', space=sflag, size = 0x4, scoped, tag = 'scoped memory for tpu_custom_call.1']
    #allocation9 [shape = 'u8[16384]{0}', space=vmem, size = 0x4000, scoped, tag = 'input window, operand 2, single buffered']
    #allocation10 [shape = 'u8[8192]{0}', space=vmem, size = 0x2000, scoped, tag = 'output window, operand 0, single buffered']
    %8 = vsyncpa [#allocation5], 0
    %9 = vsyncpa [#allocation8], 0
    %10 = vsyncpa [#allocation6], 0
    // Predicated region
    $region2: #{tpu_custom_call.1} parent=1 // pred_check
      _
    $region3: #{tpu_custom_call.1} parent=1 // pred_check_branch
      %12 = sbr.rel (0) target = $region5
    $region4: #{tpu_custom_call.1} parent=1 // pred_region
      %s14 = ssub.s32 256, 256
      %15 = vsyncadd [#allocation5], %s14
      %s16 = sshll.u32 [#allocation4], 4
      %s17 = int_to_ptr.vmem [resolvable:$true] %s16
      %22 = dma.hbm_to_vmem [thread:$0]  %s0, 256, %s17, [#allocation5], 128, 128, 8
    $region5: #{tpu_custom_call.1} parent=1 // pred_fallthru
      _
    // Predicated region
    $region6: #{tpu_custom_call.1} parent=1 // pred_check
      _
    $region7: #{tpu_custom_call.1} parent=1 // pred_check_branch
      %24 = sbr.rel (0) target = $region9
    $region8: #{tpu_custom_call.1} parent=1 // pred_region
      %s26 = ssub.s32 512, 512
      %27 = vsyncadd [#allocation8], %s26
      %s28 = sshll.u32 [#allocation7], 4
      %s29 = int_to_ptr.vmem [resolvable:$true] %s28
      %34 = dma.hbm_to_vmem [thread:$0]  %s1, 512, %s29, [#allocation8], 128, 128, 8
    $region9: #{tpu_custom_call.1} parent=1 // pred_fallthru
      _
    // Predicated region
    $region10: #{tpu_custom_call.1} parent=1 // pred_check
      _
    $region11: #{tpu_custom_call.1} parent=1 // pred_check_branch
      %36 = sbr.rel (0) target = $region13
    $region12: #{tpu_custom_call.1} parent=1 // pred_region
      %s38 = ssub.s32 512, 512
      %39 = vsyncadd [#allocation8], %s38
      %s40 = sshll.u32 [#allocation9], 4
      %s41 = int_to_ptr.vmem [resolvable:$true] %s40
      %46 = dma.hbm_to_vmem [thread:$0]  %s2, 512, %s41, [#allocation8], 128, 128, 8
    $region13: #{tpu_custom_call.1} parent=1 // pred_fallthru
      _
    // Predicated region
    $region14: #{tpu_custom_call.1} parent=1 // pred_check
      _
    $region15: #{tpu_custom_call.1} parent=1 // pred_check_branch
      %48 = sbr.rel (0) target = $region17
    $region16: #{tpu_custom_call.1} parent=1 // pred_region
      %49 = dma.done [#allocation5], 256
    $region17: #{tpu_custom_call.1} parent=1 // pred_fallthru
      _
    // Predicated region
    $region18: #{tpu_custom_call.1} parent=1 // pred_check
      _
    $region19: #{tpu_custom_call.1} parent=1 // pred_check_branch
      %51 = sbr.rel (0) target = $region21
    $region20: #{tpu_custom_call.1} parent=1 // pred_region
      %52 = dma.done [#allocation8], 512
    $region21: #{tpu_custom_call.1} parent=1 // pred_fallthru
      _
    // Predicated region
    $region22: #{tpu_custom_call.1} parent=1 // pred_check
      _
    $region23: #{tpu_custom_call.1} parent=1 // pred_check_branch
      %54 = sbr.rel (0) target = $region25
    $region24: #{tpu_custom_call.1} parent=1 // pred_region
      %55 = dma.done [#allocation8], 512
    $region25: #{tpu_custom_call.1} parent=1 // pred_fallthru
      _
    %p56 = scmp.eq.s32.totalorder 0, 0
    // Predicated region
    $region26: #{tpu_custom_call.1} parent=1 // pred_check
      %p57 = pneg %p56
    $region27: #{tpu_custom_call.1} parent=1 // pred_check_branch
      %59 = sbr.rel (%p57) target = $region29
    $region28: #{tpu_custom_call.1} parent=1 // pred_region
      %vm60 = vcmask 261120
      %61 = vst.msk [vmem:[#allocation2] sm:$0xff] %vm60, 0.0
      %62 = vst.msk [vmem:[#allocation2 + $0x8] sm:$0xff] %vm60, 0.0
      %63 = vst.msk [vmem:[#allocation3] sm:$0xff] %vm60, 0.0
      %64 = vst.msk [vmem:[#allocation3 + $0x8] sm:$0xff] %vm60, 0.0
    $region29: #{tpu_custom_call.1} parent=1 // pred_fallthru
      _
    %v65 = vld [vmem:[#allocation4] sm:$0xff]
    %v66 = vld [vmem:[#allocation4 + $0x8] sm:$0xff]
    %v67 = vld [vmem:[#allocation2] sm:$0xff]
    %v68 = vld [vmem:[#allocation2 + $0x8] sm:$0xff]
    %v69 = vld [vmem:[#allocation7] sm:$0xff]
    %v70 = vld [vmem:[#allocation7 + $0x8] sm:$0xff]
    %v71 = vld [vmem:[#allocation7 + $0x10] sm:$0xff]
    %v72 = vld [vmem:[#allocation7 + $0x18] sm:$0xff]
    %vm73 = vcmask 261120
    %v75 = vsel %vm73, %v65, 0
    %v78 = vsel %vm73, %v66, 0
    %80 = vmatprep.subr.mxu0 0.0
    %81 = vmatpush1.msra.mxu0 %v69
    %82 = vmatprep.subr.mxu0 0.0
    %83 = vmatpush1.msra.mxu0 %v70
    %84 = vmatprep.subr.mxu0 0.0
    %85 = vmatpush1.msra.mxu0 %v71
    %86 = vmatprep.subr.mxu0 0.0
    %87 = vmatpush1.msra.mxu0 %v72
    %88 = vmatprep.subr.mxu0 0.0
    %89 = vmatpush1.msra.mxu0 0.0
    %90 = vmatprep.subr.mxu0 0.0
    %91 = vmatpush1.msra.mxu0 0.0
    %92 = vmatprep.subr.mxu0 0.0
    %93 = vmatpush1.msra.mxu0 0.0
    %94 = vmatprep.subr.mxu0 0.0
    %95 = vmatpush1.msra.mxu0 0.0
    %96 = vmatprep.subr.mxu0 0.0
    %97 = vmatpush1.msra.mxu0 0.0
    %98 = vmatprep.subr.mxu0 0.0
    %99 = vmatpush1.msra.mxu0 0.0
    %100 = vmatprep.subr.mxu0 0.0
    %101 = vmatpush1.msra.mxu0 0.0
    %102 = vmatprep.subr.mxu0 0.0
    %103 = vmatpush1.msra.mxu0 0.0
    %104 = vmatprep.subr.mxu0 0.0
    %105 = vmatpush1.msra.mxu0 0.0
    %106 = vmatprep.subr.mxu0 0.0
    %107 = vmatpush1.msra.mxu0 0.0
    %108 = vmatprep.subr.mxu0 0.0
    %109 = vmatpush1.msra.mxu0 0.0
    %110 = vmatprep.subr.mxu0 0.0
    %111 = vmatpush1.msra.mxu0 0.0
    %112 = vmatprep.subr.mxu0 0.0
    %113 = vmatpush1.msra.mxu0 0.0
    %114 = vmatprep.subr.mxu0 0.0
    %115 = vmatpush1.msra.mxu0 0.0
    %116 = vmatprep.subr.mxu0 0.0
    %117 = vmatpush1.msra.mxu0 0.0
    %118 = vmatprep.subr.mxu0 0.0
    %119 = vmatpush1.msra.mxu0 0.0
    %120 = vmatprep.subr.mxu0 0.0
    %121 = vmatpush1.msra.mxu0 0.0
    %122 = vmatprep.subr.mxu0 0.0
    %123 = vmatpush1.msra.mxu0 0.0
    %124 = vmatprep.subr.mxu0 0.0
    %125 = vmatpush1.msra.mxu0 0.0
    %126 = vmatprep.subr.mxu0 0.0
    %127 = vmatpush1.msra.mxu0 0.0
    %128 = vmatprep.subr.mxu0 0.0
    %129 = vmatpush1.msra.mxu0 0.0
    %130 = vmatprep.subr.mxu0 0.0
    %131 = vmatpush1.msra.mxu0 0.0
    %132 = vmatprep.subr.mxu0 0.0
    %133 = vmatpush1.msra.mxu0 0.0
    %134 = vmatprep.subr.mxu0 0.0
    %135 = vmatpush1.msra.mxu0 0.0
    %136 = vmatprep.subr.mxu0 0.0
    %137 = vmatpush1.msra.mxu0 0.0
    %138 = vmatprep.subr.mxu0 0.0
    %139 = vmatpush1.msra.mxu0 0.0
    %140 = vmatprep.subr.mxu0 0.0
    %141 = vmatpush1.msra.mxu0 0.0
    %142 = vmatprep.subr.mxu0 0.0
    %143 = vmatpush1.msra.mxu0 0.0
    %144 = vmatprep.mubr.f32.mxu0 0.0
    %145 = vmatmul.mubr.f32.gmra.mrb[0].mxu0 %v75
    %v146 = vpop.f32.mrb[0].mxu0
    %v147 = vadd.f32 0.0, %v146
    %v148 = vpop.f32.mrb[0].mxu0
    %149 = vmatprep.mubr.f32.mxu0 0.0
    %150 = vmatmul.mubr.f32.gmra.mrb[0].mxu0 %v78
    %v151 = vpop.f32.mrb[0].mxu0
    %v152 = vadd.f32 0.0, %v151
    %v153 = vpop.f32.mrb[0].mxu0
    %154 = vdwg.mxu0
    %v155 = vadd.f32 %v67, %v147
    %v156 = vadd.f32 %v68, %v152
    %157 = vst.msk [vmem:[#allocation2] sm:$0xff] %vm73, %v155
    %158 = vst.msk [vmem:[#allocation2 + $0x8] sm:$0xff] %vm73, %v156
    %v159 = vld [vmem:[#allocation3] sm:$0xff]
    %v160 = vld [vmem:[#allocation3 + $0x8] sm:$0xff]
    %v161 = vld [vmem:[#allocation9] sm:$0xff]
    %v162 = vld [vmem:[#allocation9 + $0x8] sm:$0xff]
    %v163 = vld [vmem:[#allocation9 + $0x10] sm:$0xff]
    %v164 = vld [vmem:[#allocation9 + $0x18] sm:$0xff]
    %165 = vmatprep.subr.mxu0 0.0
    %166 = vmatpush1.msra.mxu0 %v161
    %167 = vmatprep.subr.mxu0 0.0
    %168 = vmatpush1.msra.mxu0 %v162
    %169 = vmatprep.subr.mxu0 0.0
    %170 = vmatpush1.msra.mxu0 %v163
    %171 = vmatprep.subr.mxu0 0.0
    %172 = vmatpush1.msra.mxu0 %v164
    %173 = vmatprep.subr.mxu0 0.0
    %174 = vmatpush1.msra.mxu0 0.0
    %175 = vmatprep.subr.mxu0 0.0
    %176 = vmatpush1.msra.mxu0 0.0
    %177 = vmatprep.subr.mxu0 0.0
    %178 = vmatpush1.msra.mxu0 0.0
    %179 = vmatprep.subr.mxu0 0.0
    %180 = vmatpush1.msra.mxu0 0.0
    %181 = vmatprep.subr.mxu0 0.0
    %182 = vmatpush1.msra.mxu0 0.0
    %183 = vmatprep.subr.mxu0 0.0
    %184 = vmatpush1.msra.mxu0 0.0
    %185 = vmatprep.subr.mxu0 0.0
    %186 = vmatpush1.msra.mxu0 0.0
    %187 = vmatprep.subr.mxu0 0.0
    %188 = vmatpush1.msra.mxu0 0.0
    %189 = vmatprep.subr.mxu0 0.0
    %190 = vmatpush1.msra.mxu0 0.0
    %191 = vmatprep.subr.mxu0 0.0
    %192 = vmatpush1.msra.mxu0 0.0
    %193 = vmatprep.subr.mxu0 0.0
    %194 = vmatpush1.msra.mxu0 0.0
    %195 = vmatprep.subr.mxu0 0.0
    %196 = vmatpush1.msra.mxu0 0.0
    %197 = vmatprep.subr.mxu0 0.0
    %198 = vmatpush1.msra.mxu0 0.0
    %199 = vmatprep.subr.mxu0 0.0
    %200 = vmatpush1.msra.mxu0 0.0
    %201 = vmatprep.subr.mxu0 0.0
    %202 = vmatpush1.msra.mxu0 0.0
    %203 = vmatprep.subr.mxu0 0.0
    %204 = vmatpush1.msra.mxu0 0.0
    %205 = vmatprep.subr.mxu0 0.0
    %206 = vmatpush1.msra.mxu0 0.0
    %207 = vmatprep.subr.mxu0 0.0
    %208 = vmatpush1.msra.mxu0 0.0
    %209 = vmatprep.subr.mxu0 0.0
    %210 = vmatpush1.msra.mxu0 0.0
    %211 = vmatprep.subr.mxu0 0.0
    %212 = vmatpush1.msra.mxu0 0.0
    %213 = vmatprep.subr.mxu0 0.0
    %214 = vmatpush1.msra.mxu0 0.0
    %215 = vmatprep.subr.mxu0 0.0
    %216 = vmatpush1.msra.mxu0 0.0
    %217 = vmatprep.subr.mxu0 0.0
    %218 = vmatpush1.msra.mxu0 0.0
    %219 = vmatprep.subr.mxu0 0.0
    %220 = vmatpush1.msra.mxu0 0.0
    %221 = vmatprep.subr.mxu0 0.0
    %222 = vmatpush1.msra.mxu0 0.0
    %223 = vmatprep.subr.mxu0 0.0
    %224 = vmatpush1.msra.mxu0 0.0
    %225 = vmatprep.subr.mxu0 0.0
    %226 = vmatpush1.msra.mxu0 0.0
    %227 = vmatprep.subr.mxu0 0.0
    %228 = vmatpush1.msra.mxu0 0.0
    %229 = vmatprep.mubr.f32.mxu0 0.0
    %230 = vmatmul.mubr.f32.gmra.mrb[0].mxu0 %v75
    %v231 = vpop.f32.mrb[0].mxu0
    %v232 = vadd.f32 0.0, %v231
    %v233 = vpop.f32.mrb[0].mxu0
    %234 = vmatprep.mubr.f32.mxu0 0.0
    %235 = vmatmul.mubr.f32.gmra.mrb[0].mxu0 %v78
    %v236 = vpop.f32.mrb[0].mxu0
    %v237 = vadd.f32 0.0, %v236
    %v238 = vpop.f32.mrb[0].mxu0
    %239 = vdwg.mxu0
    %v240 = vadd.f32 %v159, %v232
    %v241 = vadd.f32 %v160, %v237
    %242 = vst.msk [vmem:[#allocation3] sm:$0xff] %vm73, %v240
    %243 = vst.msk [vmem:[#allocation3 + $0x8] sm:$0xff] %vm73, %v241
    // Predicated region
    $region30: #{tpu_custom_call.1} parent=1 // pred_check
      %p244 = pneg %p56
    $region31: #{tpu_custom_call.1} parent=1 // pred_check_branch
      %246 = sbr.rel (%p244) target = $region33
    $region32: #{tpu_custom_call.1} parent=1 // pred_region
      %v247 = vld [vmem:[#allocation2] sm:$0xff]
      %v248 = vld [vmem:[#allocation2 + $0x8] sm:$0xff]
      %v249 = vxor.u32 %v247, 2147483648
      %v250 = vxor.u32 %v248, 2147483648
      %v251 = vmul.f32 %v249, 1.442695
      %v252 = vpow.pop %v251
      %v253 = vmul.f32 %v250, 1.442695
      %v254 = vpow.pop %v253
      %v255 = vadd.f32 %v252, 1.0
      %v256 = vadd.f32 %v254, 1.0
      %v257 = vrcp.pop %v255
      %v258 = vmul.f32 1.0, %v257
      %v259 = vrcp.pop %v256
      %v260 = vmul.f32 1.0, %v259
      %v261 = vmul.f32 %v247, %v258
      %v262 = vmul.f32 %v248, %v260
      %v263 = vld [vmem:[#allocation3] sm:$0xff]
      %v264 = vld [vmem:[#allocation3 + $0x8] sm:$0xff]
      %v265 = vmul.f32 %v261, %v263
      %v266 = vmul.f32 %v262, %v264
      %267 = vst.msk [vmem:[#allocation10] sm:$0xff] %vm73, %v265
      %268 = vst.msk [vmem:[#allocation10 + $0x8] sm:$0xff] %vm73, %v266
    $region33: #{tpu_custom_call.1} parent=1 // pred_fallthru
      _
    // Predicated region
    $region34: #{tpu_custom_call.1} parent=1 // pred_check
      _
    $region35: #{tpu_custom_call.1} parent=1 // pred_check_branch
      %270 = sbr.rel (0) target = $region37
    $region36: #{tpu_custom_call.1} parent=1 // pred_region
      %s272 = ssub.s32 256, 256
      %273 = vsyncadd [#allocation6], %s272
      %s274 = sshll.u32 [#allocation10], 4
      %s275 = int_to_ptr.vmem [resolvable:$true] %s274
      %280 = dma.vmem_to_hbm [thread:$0]  %s275, 256, %s3, [#allocation6], 128, 128, 8
    $region37: #{tpu_custom_call.1} parent=1 // pred_fallthru
      _
    // Predicated region
    $region38: #{tpu_custom_call.1} parent=1 // pred_check
      _
    $region39: #{tpu_custom_call.1} parent=1 // pred_check_branch
      %282 = sbr.rel (0) target = $region41
    $region40: #{tpu_custom_call.1} parent=1 // pred_region
      %283 = dma.done [#allocation6], 256
    $region41: #{tpu_custom_call.1} parent=1 // pred_fallthru
      _
    %284 = vsyncpa [#allocation5], 1
    %285 = vsyncpa [#allocation8], 1
    %286 = vsyncpa [#allocation6], 1

</llo_original>
